<compile_context>
chip_gen: v7x
topology: tpu7x:2x2x1
jax: 0.10.0
libtpu: 0.0.40
codegen_flags: <defaults>
</compile_context>

<pallas_src>
import functools

import jax
import jax.numpy as jnp
from jax import lax
from jax.experimental import pallas as pl
from jax.experimental.pallas import tpu as pltpu

_NORM_EPS = 1e-12   # F.normalize(p=2) eps
_COS_EPS = 1e-8     # F.cosine_similarity eps
_LANES = 128


def _sym_cosine_kernel(label_ref, x_ref, out_ref, *, n_batch, tb, ch, w, inv_ch):
    """One grid step processes `tb` batch elements; x block is (tb, C*H, W)."""
    i = pl.program_id(0)

    x = x_ref[...].astype(jnp.float32)                        # (tb, ch, w)

    # ||x_row||^2 along W (dim=3 of NCHW) and the F.normalize scale.
    ss = jnp.sum(x * x, axis=-1, keepdims=True)               # (tb, ch, 1)
    rinv = 1.0 / jnp.maximum(jnp.sqrt(ss), _NORM_EPS)
    scale = rinv * rinv

    # In-kernel flip along W via the exchange (anti-identity) matrix on the MXU.
    row = lax.broadcasted_iota(jnp.int32, (w, w), 0)
    col = lax.broadcasted_iota(jnp.int32, (w, w), 1)
    j_mat = (row + col == w - 1).astype(jnp.float32)          # (w, w)
    xf = jnp.dot(x.reshape(tb * ch, w), j_mat,
                 preferred_element_type=jnp.float32).reshape(tb, ch, w)

    # cosine_similarity(xn, flip(xn), dim=3) with xn = x * rinv.
    # flip is norm-invariant => w2 == w1, and rinv^2 factors out of both terms.
    w12 = jnp.sum(x * xf, axis=-1, keepdims=True) * scale     # (tb, ch, 1)
    w1 = ss * scale                                           # == w2
    cos = w12 / jnp.maximum(w1, _COS_EPS)                     # (tb, ch, 1)

    # mean over (C, H) -> one value per batch element.
    cos_b = jnp.sum(cos, axis=1) * inv_ch                     # (tb, 1)

    # Mask batch rows past B in the (possibly ragged) last block.
    bidx = i * tb + lax.broadcasted_iota(jnp.int32, (tb, 1), 0)
    valid = bidx < n_batch
    cos_b = jnp.where(valid, cos_b, 0.0)

    # Single exp, gated by the label: exp(-cos) if label==0, exp(+cos) if ==1,
    # 0 otherwise (matches the torch.where pair).
    lbl = label_ref[...]                                      # (tb, 1) int32
    is0 = lbl == 0
    gate = jnp.logical_and(jnp.logical_or(is0, lbl == 1), valid)
    sign = jnp.where(is0, -1.0, 1.0)
    contrib = gate.astype(jnp.float32) * jnp.exp(sign * cos_b)  # (tb, 1)

    # Per-block partial sum, written lane-dense; final mean over B is in glue.
    partial = jnp.sum(contrib, axis=0, keepdims=True)         # (1, 1)
    out_ref[...] = jnp.broadcast_to(partial, (1, _LANES))


def sym_cosine_loss(x, label, *, block_bytes=2 << 20):
    """x: (B, C, H, W) float (native dtype ok), label: (B,) int. Scalar f32 loss."""
    B, C, H, W = x.shape
    CH = C * H
    x3 = x.reshape(B, CH, W)                  # free view of contiguous NCHW
    label2 = label.astype(jnp.int32).reshape(B, 1)

    # Pick TB (batch elements per grid step): largest TB whose sublane/lane
    # padded block fits a small VMEM budget.  Keep TB == B or a multiple of 8
    # so the (TB, 1) label block stays tile-aligned.
    sub_pad = -(-CH // 8) * 8
    lane_pad = -(-W // _LANES) * _LANES
    per_elt = sub_pad * lane_pad * x.dtype.itemsize
    if B * per_elt <= block_bytes:
        tb = B
    else:
        tb = min(B, max(8, (block_bytes // per_elt) // 8 * 8))
    grid = pl.cdiv(B, tb)

    kernel = functools.partial(
        _sym_cosine_kernel, n_batch=B, tb=tb, ch=CH, w=W, inv_ch=1.0 / CH)

    partials = pl.pallas_call(
        kernel,
        out_shape=jax.ShapeDtypeStruct((grid, _LANES), jnp.float32),
        grid_spec=pltpu.PrefetchScalarGridSpec(
            num_scalar_prefetch=0,
            grid=(grid,),
            in_specs=[
                pl.BlockSpec((tb, 1), lambda i: (i, 0)),        # labels
                pl.BlockSpec((tb, CH, W), lambda i: (i, 0, 0)),  # activations
            ],
            out_specs=pl.BlockSpec((1, _LANES), lambda i: (i, 0)),
        ),
        compiler_params=pltpu.CompilerParams(
            dimension_semantics=("parallel",)),  # no cross-step state
    )(label2, x3)

    # Tiny epilogue: sum of per-block partial sums, then mean over batch.
    return jnp.sum(partials[:, 0]) / B


def _reference(x, label):
    """Plain-JAX replica of the PyTorch forward for verification."""
    x = x.astype(jnp.float32)
    xn = x / jnp.maximum(
        jnp.sqrt(jnp.sum(x * x, axis=3, keepdims=True)), _NORM_EPS)
    xf = jnp.flip(xn, axis=3)
    w12 = jnp.sum(xn * xf, axis=3)
    w1 = jnp.sum(xn * xn, axis=3)
    w2 = jnp.sum(xf * xf, axis=3)
    cos = w12 / jnp.sqrt(jnp.maximum(w1 * w2, _COS_EPS * _COS_EPS))
    cos = jnp.mean(cos, axis=(1, 2))
    sym = jnp.where(label == 0, jnp.exp(-cos), 0.0)
    dis_sym = jnp.where(label == 1, jnp.exp(cos), 0.0)
    return jnp.mean(sym + dis_sym)


if __name__ == "__main__":
    # SymCosineLoss has no trainable parameters (weight arg is unused).
    key = jax.random.PRNGKey(0)
    kx, _ = jax.random.split(key)
    B, C, H, W = 2, 4, 16, 16
    x = jax.random.normal(kx, (B, C, H, W), dtype=jnp.float32)
    label = jnp.array([0, 1], dtype=jnp.int32)

    loss = jax.block_until_ready(sym_cosine_loss(x, label))
    ref = jax.block_until_ready(_reference(x, label))

    assert loss.shape == (), f"expected scalar loss, got {loss.shape}"
    assert jnp.allclose(loss, ref, rtol=1e-5, atol=1e-5), (loss, ref)
    print("KERNEL_OK")
</pallas_src>

<mosaic_0001>
module attributes {stable_mosaic.version = 11 : i64} {
  func.func @_sym_cosine_kernel(%arg0: i32, %arg1: memref<2x1xi32, #tpu.memory_space<vmem>>, %arg2: memref<2x64x16xf32, #tpu.memory_space<vmem>>, %arg3: memref<1x128xf32, #tpu.memory_space<vmem>>) attributes {dimension_semantics = [#tpu.dimension_semantics<parallel>], iteration_bounds = array<i64: 1>, scalar_prefetch = 0 : i64, scratch_operands = 0 : i64, tpu.core_type = #tpu.core_type<tc>, window_params = [{transform_indices = @transform_0, window_bounds = array<i64: 2, 1>}, {transform_indices = @transform_1, window_bounds = array<i64: 2, 64, 16>}, {transform_indices = @transform_2, window_bounds = array<i64: 1, 128>}]} {
    %c0 = arith.constant 0 : index
    %c0_0 = arith.constant 0 : index
    %c0_1 = arith.constant 0 : index
    %0 = vector.load %arg2[%c0, %c0_0, %c0_1] : memref<2x64x16xf32, #tpu.memory_space<vmem>>, vector<2x64x16xf32>
    %1 = arith.mulf %0, %0 : vector<2x64x16xf32>
    %cst = arith.constant dense<0.000000e+00> : vector<2x64xf32>
    %2 = vector.multi_reduction <add>, %1, %cst [2] : vector<2x64x16xf32> to vector<2x64xf32>
    %3 = vector.shape_cast %2 : vector<2x64xf32> to vector<2x64x1xf32>
    %4 = math.sqrt %3 : vector<2x64x1xf32>
    %cst_2 = arith.constant 9.99999996E-13 : f32
    %5 = vector.broadcast %cst_2 : f32 to vector<2x64x1xf32>
    %6 = arith.maximumf %4, %5 : vector<2x64x1xf32>
    %cst_3 = arith.constant 1.000000e+00 : f32
    %7 = vector.broadcast %cst_3 : f32 to vector<2x64x1xf32>
    %8 = arith.divf %7, %6 : vector<2x64x1xf32>
    %9 = arith.mulf %8, %8 : vector<2x64x1xf32>
    %10 = tpu.iota {dimensions = array<i32: 0>} : vector<16x16xi32>
    %11 = tpu.iota {dimensions = array<i32: 1>} : vector<16x16xi32>
    %12 = arith.addi %10, %11 : vector<16x16xi32>
    %c15_i32 = arith.constant 15 : i32
    %13 = vector.broadcast %c15_i32 : i32 to vector<16x16xi32>
    %14 = arith.cmpi eq, %12, %13 : vector<16x16xi32>
    %15 = arith.extui %14 : vector<16x16xi1> to vector<16x16xi32>
    %16 = arith.sitofp %15 : vector<16x16xi32> to vector<16x16xf32>
    %17 = vector.shape_cast %0 : vector<2x64x16xf32> to vector<128x16xf32>
    %cst_4 = arith.constant dense<0.000000e+00> : vector<128x16xf32>
    %18 = tpu.matmul %17, %16, %cst_4 {dimension_numbers = #tpu.dot_dimension_numbers<[1], [0], [0], [1], [0, 0, 1, 1], [], []>} : vector<128x16xf32>, vector<16x16xf32>, vector<128x16xf32> -> vector<128x16xf32>
    %19 = vector.shape_cast %18 : vector<128x16xf32> to vector<2x64x16xf32>
    %20 = arith.mulf %0, %19 : vector<2x64x16xf32>
    %cst_5 = arith.constant dense<0.000000e+00> : vector<2x64xf32>
    %21 = vector.multi_reduction <add>, %20, %cst_5 [2] : vector<2x64x16xf32> to vector<2x64xf32>
    %22 = vector.shape_cast %21 : vector<2x64xf32> to vector<2x64x1xf32>
    %23 = arith.mulf %22, %9 : vector<2x64x1xf32>
    %24 = arith.mulf %3, %9 : vector<2x64x1xf32>
    %cst_6 = arith.constant 9.99999993E-9 : f32
    %25 = vector.broadcast %cst_6 : f32 to vector<2x64x1xf32>
    %26 = arith.maximumf %24, %25 : vector<2x64x1xf32>
    %27 = arith.divf %23, %26 : vector<2x64x1xf32>
    %cst_7 = arith.constant dense<0.000000e+00> : vector<2x1xf32>
    %28 = vector.multi_reduction <add>, %27, %cst_7 [1] : vector<2x64x1xf32> to vector<2x1xf32>
    %cst_8 = arith.constant 1.562500e-02 : f32
    %29 = vector.broadcast %cst_8 : f32 to vector<2x1xf32>
    %30 = arith.mulf %28, %29 : vector<2x1xf32>
    %c2_i32 = arith.constant 2 : i32
    %31 = arith.muli %arg0, %c2_i32 : i32
    %32 = tpu.iota {dimensions = array<i32: 0>} : vector<2x1xi32>
    %33 = vector.broadcast %31 : i32 to vector<2x1xi32>
    %34 = arith.addi %33, %32 : vector<2x1xi32>
    %c2_i32_9 = arith.constant 2 : i32
    %35 = vector.broadcast %c2_i32_9 : i32 to vector<2x1xi32>
    %36 = arith.cmpi slt, %34, %35 : vector<2x1xi32>
    %cst_10 = arith.constant 0.000000e+00 : f32
    %37 = vector.broadcast %cst_10 : f32 to vector<2x1xf32>
    %38 = arith.select %36, %30, %37 : vector<2x1xi1>, vector<2x1xf32>
    %c0_11 = arith.constant 0 : index
    %c0_12 = arith.constant 0 : index
    %39 = vector.load %arg1[%c0_11, %c0_12] : memref<2x1xi32, #tpu.memory_space<vmem>>, vector<2x1xi32>
    %c0_i32 = arith.constant 0 : i32
    %40 = vector.broadcast %c0_i32 : i32 to vector<2x1xi32>
    %41 = arith.cmpi eq, %39, %40 : vector<2x1xi32>
    %c1_i32 = arith.constant 1 : i32
    %42 = vector.broadcast %c1_i32 : i32 to vector<2x1xi32>
    %43 = arith.cmpi eq, %39, %42 : vector<2x1xi32>
    %44 = arith.ori %41, %43 : vector<2x1xi1>
    %45 = arith.andi %44, %36 : vector<2x1xi1>
    %cst_13 = arith.constant -1.000000e+00 : f32
    %cst_14 = arith.constant 1.000000e+00 : f32
    %46 = vector.broadcast %cst_13 : f32 to vector<2x1xf32>
    %47 = vector.broadcast %cst_14 : f32 to vector<2x1xf32>
    %48 = arith.select %41, %46, %47 : vector<2x1xi1>, vector<2x1xf32>
    %49 = arith.extui %45 : vector<2x1xi1> to vector<2x1xi32>
    %50 = arith.sitofp %49 : vector<2x1xi32> to vector<2x1xf32>
    %51 = arith.mulf %48, %38 : vector<2x1xf32>
    %52 = math.exp %51 : vector<2x1xf32>
    %53 = arith.mulf %50, %52 : vector<2x1xf32>
    %cst_15 = arith.constant dense<0.000000e+00> : vector<1xf32>
    %54 = vector.multi_reduction <add>, %53, %cst_15 [0] : vector<2x1xf32> to vector<1xf32>
    %55 = vector.shape_cast %54 : vector<1xf32> to vector<1x1xf32>
    %56 = vector.shape_cast %55 : vector<1x1xf32> to vector<1x1xf32>
    %57 = vector.broadcast %56 : vector<1x1xf32> to vector<1x128xf32>
    %c0_16 = arith.constant 0 : index
    %c0_17 = arith.constant 0 : index
    %58 = vector.load %arg3[%c0_16, %c0_17] : memref<1x128xf32, #tpu.memory_space<vmem>>, vector<1x128xf32>
    tpu.vector_store %arg3[%c0_16, %c0_17], %57 {strides = array<i32>} : memref<1x128xf32, #tpu.memory_space<vmem>>, vector<1x128xf32>,
    return
  }
  func.func @transform_0(%arg0: i32) -> (i32, i32) {
    %c0_i32 = arith.constant 0 : i32
    %c0_i32_0 = arith.constant 0 : i32
    return %arg0, %c0_i32 : i32, i32
  }
  func.func @transform_1(%arg0: i32) -> (i32, i32, i32) {
    %c0_i32 = arith.constant 0 : i32
    %c0_i32_0 = arith.constant 0 : i32
    %c0_i32_1 = arith.constant 0 : i32
    return %arg0, %c0_i32, %c0_i32_0 : i32, i32, i32
  }
  func.func @transform_2(%arg0: i32) -> (i32, i32) {
    %c0_i32 = arith.constant 0 : i32
    %c0_i32_0 = arith.constant 0 : i32
    return %arg0, %c0_i32 : i32, i32
  }
}

</mosaic_0001>

<llo_original>
// kernel: tpu_custom_call.1
$region0: #{tpu_custom_call.1}
  #allocation0 [shape = 'u32[]', space=smem, size = 0x4, offset = 0x4, fixed_abs, tag = 'smem constant byte address 0x4 - core index']
  #allocation1 [shape = 'u32[144,128]{1,0:T(1,128)}', space=vmem, size = 0x12000, scoped, tag = 'internal scratch']
  %s0 = inlined_call_operand.vmem [shape: s32[2,1], index: 0, kind: input, shape index: {}]
  %s1 = inlined_call_operand.vmem [shape: f32[2,64,16], index: 1, kind: input, shape index: {}]
  %s2 = inlined_call_operand.hbm [shape: f32[1,128], index: 2, kind: output, shape index: {}]
  %s3 = sld [smem:[#allocation0]]
  $region18: #{tpu_custom_call.1} parent=0
    _
  %s5 = ssub.s32 1, %s3
  %s6 = scalar_select 0, %s5, %s3
  $region1: #{tpu_custom_call.1} parent=0
    #allocation2 [shape = 'u8[512]{0}', space=vmem, size = 0x400, scoped, tag = 'output window, operand 0, single buffered']
    #allocation3 [shape = 's32[1]{0}', space=sflag, size = 0x4, scoped, tag = 'scoped memory for tpu_custom_call.1']
    %7 = vsyncpa [#allocation3], 0
    // Predicated region
    $region2: #{tpu_custom_call.1} parent=1 // pred_check
      _
    $region3: #{tpu_custom_call.1} parent=1 // pred_check_branch
      %9 = sbr.rel (0) target = $region5
    $region4: #{tpu_custom_call.1} parent=1 // pred_region
      _
    $region5: #{tpu_custom_call.1} parent=1 // pred_fallthru
      _
    // Predicated region
    $region6: #{tpu_custom_call.1} parent=1 // pred_check
      _
    $region7: #{tpu_custom_call.1} parent=1 // pred_check_branch
      %11 = sbr.rel (0) target = $region9
    $region8: #{tpu_custom_call.1} parent=1 // pred_region
      _
    $region9: #{tpu_custom_call.1} parent=1 // pred_fallthru
      _
    %v12 = vld [vmem:[%s1] sm:$0xff]
    %v13 = vld [vmem:[%s1 + $0x8] sm:$0xff]
    %v14 = vld [vmem:[%s1 + $0x10] sm:$0xff]
    %v15 = vld [vmem:[%s1 + $0x18] sm:$0xff]
    %v16 = vld [vmem:[%s1 + $0x20] sm:$0xff]
    %v17 = vld [vmem:[%s1 + $0x28] sm:$0xff]
    %v18 = vld [vmem:[%s1 + $0x30] sm:$0xff]
    %v19 = vld [vmem:[%s1 + $0x38] sm:$0xff]
    %v20 = vld [vmem:[%s1 + $0x40] sm:$0xff]
    %v21 = vld [vmem:[%s1 + $0x48] sm:$0xff]
    %v22 = vld [vmem:[%s1 + $0x50] sm:$0xff]
    %v23 = vld [vmem:[%s1 + $0x58] sm:$0xff]
    %v24 = vld [vmem:[%s1 + $0x60] sm:$0xff]
    %v25 = vld [vmem:[%s1 + $0x68] sm:$0xff]
    %v26 = vld [vmem:[%s1 + $0x70] sm:$0xff]
    %v27 = vld [vmem:[%s1 + $0x78] sm:$0xff]
    %v28 = vmul.f32 %v12, %v12
    %v29 = vmul.f32 %v13, %v13
    %v30 = vmul.f32 %v14, %v14
    %v31 = vmul.f32 %v15, %v15
    %v32 = vmul.f32 %v16, %v16
    %v33 = vmul.f32 %v17, %v17
    %v34 = vmul.f32 %v18, %v18
    %v35 = vmul.f32 %v19, %v19
    %v36 = vmul.f32 %v20, %v20
    %v37 = vmul.f32 %v21, %v21
    %v38 = vmul.f32 %v22, %v22
    %v39 = vmul.f32 %v23, %v23
    %v40 = vmul.f32 %v24, %v24
    %v41 = vmul.f32 %v25, %v25
    %v42 = vmul.f32 %v26, %v26
    %v43 = vmul.f32 %v27, %v27
    %vm44 = vcmask 130048
    %v45 = vsel %vm44, %v28, 0.0
    %46 = vadd.xlane.f32.xlu0 %v45
    %v47 = vpop.xlane.xlu0 %46
    %v48 = vsel %vm44, %v29, 0.0
    %49 = vadd.xlane.f32.xlu0 %v48
    %v50 = vpop.xlane.xlu0 %49
    %v51 = vsel %vm44, %v30, 0.0
    %52 = vadd.xlane.f32.xlu0 %v51
    %v53 = vpop.xlane.xlu0 %52
    %v54 = vsel %vm44, %v31, 0.0
    %55 = vadd.xlane.f32.xlu0 %v54
    %v56 = vpop.xlane.xlu0 %55
    %v57 = vsel %vm44, %v32, 0.0
    %58 = vadd.xlane.f32.xlu0 %v57
    %v59 = vpop.xlane.xlu0 %58
    %v60 = vsel %vm44, %v33, 0.0
    %61 = vadd.xlane.f32.xlu0 %v60
    %v62 = vpop.xlane.xlu0 %61
    %v63 = vsel %vm44, %v34, 0.0
    %64 = vadd.xlane.f32.xlu0 %v63
    %v65 = vpop.xlane.xlu0 %64
    %v66 = vsel %vm44, %v35, 0.0
    %67 = vadd.xlane.f32.xlu0 %v66
    %v68 = vpop.xlane.xlu0 %67
    %v69 = vsel %vm44, %v36, 0.0
    %70 = vadd.xlane.f32.xlu0 %v69
    %v71 = vpop.xlane.xlu0 %70
    %v72 = vsel %vm44, %v37, 0.0
    %73 = vadd.xlane.f32.xlu0 %v72
    %v74 = vpop.xlane.xlu0 %73
    %v75 = vsel %vm44, %v38, 0.0
    %76 = vadd.xlane.f32.xlu0 %v75
    %v77 = vpop.xlane.xlu0 %76
    %v78 = vsel %vm44, %v39, 0.0
    %79 = vadd.xlane.f32.xlu0 %v78
    %v80 = vpop.xlane.xlu0 %79
    %v81 = vsel %vm44, %v40, 0.0
    %82 = vadd.xlane.f32.xlu0 %v81
    %v83 = vpop.xlane.xlu0 %82
    %v84 = vsel %vm44, %v41, 0.0
    %85 = vadd.xlane.f32.xlu0 %v84
    %v86 = vpop.xlane.xlu0 %85
    %v87 = vsel %vm44, %v42, 0.0
    %88 = vadd.xlane.f32.xlu0 %v87
    %v89 = vpop.xlane.xlu0 %88
    %v90 = vsel %vm44, %v43, 0.0
    %91 = vadd.xlane.f32.xlu0 %v90
    %v92 = vpop.xlane.xlu0 %91
    %v93 = vrsqrt.pop %v47
    %v94 = vmul.f32 %v47, %v93
    %vm95 = vcmp.eq.f32.partialorder %v47, inf
    %v96 = vsel %vm95, %v47, %v94
    %vm97 = vcmp.eq.f32.partialorder %v47, 0.0
    %v98 = vand.u32 %v47, 2147483648
    %v99 = vsel %vm97, %v98, %v96
    %v100 = vrsqrt.pop %v50
    %v101 = vmul.f32 %v50, %v100
    %vm102 = vcmp.eq.f32.partialorder %v50, inf
    %v103 = vsel %vm102, %v50, %v101
    %vm104 = vcmp.eq.f32.partialorder %v50, 0.0
    %v105 = vand.u32 %v50, 2147483648
    %v106 = vsel %vm104, %v105, %v103
    %v107 = vrsqrt.pop %v53
    %v108 = vmul.f32 %v53, %v107
    %vm109 = vcmp.eq.f32.partialorder %v53, inf
    %v110 = vsel %vm109, %v53, %v108
    %vm111 = vcmp.eq.f32.partialorder %v53, 0.0
    %v112 = vand.u32 %v53, 2147483648
    %v113 = vsel %vm111, %v112, %v110
    %v114 = vrsqrt.pop %v56
    %v115 = vmul.f32 %v56, %v114
    %vm116 = vcmp.eq.f32.partialorder %v56, inf
    %v117 = vsel %vm116, %v56, %v115
    %vm118 = vcmp.eq.f32.partialorder %v56, 0.0
    %v119 = vand.u32 %v56, 2147483648
    %v120 = vsel %vm118, %v119, %v117
    %v121 = vrsqrt.pop %v59
    %v122 = vmul.f32 %v59, %v121
    %vm123 = vcmp.eq.f32.partialorder %v59, inf
    %v124 = vsel %vm123, %v59, %v122
    %vm125 = vcmp.eq.f32.partialorder %v59, 0.0
    %v126 = vand.u32 %v59, 2147483648
    %v127 = vsel %vm125, %v126, %v124
    %v128 = vrsqrt.pop %v62
    %v129 = vmul.f32 %v62, %v128
    %vm130 = vcmp.eq.f32.partialorder %v62, inf
    %v131 = vsel %vm130, %v62, %v129
    %vm132 = vcmp.eq.f32.partialorder %v62, 0.0
    %v133 = vand.u32 %v62, 2147483648
    %v134 = vsel %vm132, %v133, %v131
    %v135 = vrsqrt.pop %v65
    %v136 = vmul.f32 %v65, %v135
    %vm137 = vcmp.eq.f32.partialorder %v65, inf
    %v138 = vsel %vm137, %v65, %v136
    %vm139 = vcmp.eq.f32.partialorder %v65, 0.0
    %v140 = vand.u32 %v65, 2147483648
    %v141 = vsel %vm139, %v140, %v138
    %v142 = vrsqrt.pop %v68
    %v143 = vmul.f32 %v68, %v142
    %vm144 = vcmp.eq.f32.partialorder %v68, inf
    %v145 = vsel %vm144, %v68, %v143
    %vm146 = vcmp.eq.f32.partialorder %v68, 0.0
    %v147 = vand.u32 %v68, 2147483648
    %v148 = vsel %vm146, %v147, %v145
    %v149 = vrsqrt.pop %v71
    %v150 = vmul.f32 %v71, %v149
    %vm151 = vcmp.eq.f32.partialorder %v71, inf
    %v152 = vsel %vm151, %v71, %v150
    %vm153 = vcmp.eq.f32.partialorder %v71, 0.0
    %v154 = vand.u32 %v71, 2147483648
    %v155 = vsel %vm153, %v154, %v152
    %v156 = vrsqrt.pop %v74
    %v157 = vmul.f32 %v74, %v156
    %vm158 = vcmp.eq.f32.partialorder %v74, inf
    %v159 = vsel %vm158, %v74, %v157
    %vm160 = vcmp.eq.f32.partialorder %v74, 0.0
    %v161 = vand.u32 %v74, 2147483648
    %v162 = vsel %vm160, %v161, %v159
    %v163 = vrsqrt.pop %v77
    %v164 = vmul.f32 %v77, %v163
    %vm165 = vcmp.eq.f32.partialorder %v77, inf
    %v166 = vsel %vm165, %v77, %v164
    %vm167 = vcmp.eq.f32.partialorder %v77, 0.0
    %v168 = vand.u32 %v77, 2147483648
    %v169 = vsel %vm167, %v168, %v166
    %v170 = vrsqrt.pop %v80
    %v171 = vmul.f32 %v80, %v170
    %vm172 = vcmp.eq.f32.partialorder %v80, inf
    %v173 = vsel %vm172, %v80, %v171
    %vm174 = vcmp.eq.f32.partialorder %v80, 0.0
    %v175 = vand.u32 %v80, 2147483648
    %v176 = vsel %vm174, %v175, %v173
    %v177 = vrsqrt.pop %v83
    %v178 = vmul.f32 %v83, %v177
    %vm179 = vcmp.eq.f32.partialorder %v83, inf
    %v180 = vsel %vm179, %v83, %v178
    %vm181 = vcmp.eq.f32.partialorder %v83, 0.0
    %v182 = vand.u32 %v83, 2147483648
    %v183 = vsel %vm181, %v182, %v180
    %v184 = vrsqrt.pop %v86
    %v185 = vmul.f32 %v86, %v184
    %vm186 = vcmp.eq.f32.partialorder %v86, inf
    %v187 = vsel %vm186, %v86, %v185
    %vm188 = vcmp.eq.f32.partialorder %v86, 0.0
    %v189 = vand.u32 %v86, 2147483648
    %v190 = vsel %vm188, %v189, %v187
    %v191 = vrsqrt.pop %v89
    %v192 = vmul.f32 %v89, %v191
    %vm193 = vcmp.eq.f32.partialorder %v89, inf
    %v194 = vsel %vm193, %v89, %v192
    %vm195 = vcmp.eq.f32.partialorder %v89, 0.0
    %v196 = vand.u32 %v89, 2147483648
    %v197 = vsel %vm195, %v196, %v194
    %v198 = vrsqrt.pop %v92
    %v199 = vmul.f32 %v92, %v198
    %vm200 = vcmp.eq.f32.partialorder %v92, inf
    %v201 = vsel %vm200, %v92, %v199
    %vm202 = vcmp.eq.f32.partialorder %v92, 0.0
    %v203 = vand.u32 %v92, 2147483648
    %v204 = vsel %vm202, %v203, %v201
    %v205 = vmax.f32 %v99, 1e-12
    %v206 = vmax.f32 %v106, 1e-12
    %v207 = vmax.f32 %v113, 1e-12
    %v208 = vmax.f32 %v120, 1e-12
    %v209 = vmax.f32 %v127, 1e-12
    %v210 = vmax.f32 %v134, 1e-12
    %v211 = vmax.f32 %v141, 1e-12
    %v212 = vmax.f32 %v148, 1e-12
    %v213 = vmax.f32 %v155, 1e-12
    %v214 = vmax.f32 %v162, 1e-12
    %v215 = vmax.f32 %v169, 1e-12
    %v216 = vmax.f32 %v176, 1e-12
    %v217 = vmax.f32 %v183, 1e-12
    %v218 = vmax.f32 %v190, 1e-12
    %v219 = vmax.f32 %v197, 1e-12
    %v220 = vmax.f32 %v204, 1e-12
    %v221 = vrcp.pop %v205
    %v222 = vmul.f32 1.0, %v221
    %v223 = vrcp.pop %v206
    %v224 = vmul.f32 1.0, %v223
    %v225 = vrcp.pop %v207
    %v226 = vmul.f32 1.0, %v225
    %v227 = vrcp.pop %v208
    %v228 = vmul.f32 1.0, %v227
    %v229 = vrcp.pop %v209
    %v230 = vmul.f32 1.0, %v229
    %v231 = vrcp.pop %v210
    %v232 = vmul.f32 1.0, %v231
    %v233 = vrcp.pop %v211
    %v234 = vmul.f32 1.0, %v233
    %v235 = vrcp.pop %v212
    %v236 = vmul.f32 1.0, %v235
    %v237 = vrcp.pop %v213
    %v238 = vmul.f32 1.0, %v237
    %v239 = vrcp.pop %v214
    %v240 = vmul.f32 1.0, %v239
    %v241 = vrcp.pop %v215
    %v242 = vmul.f32 1.0, %v241
    %v243 = vrcp.pop %v216
    %v244 = vmul.f32 1.0, %v243
    %v245 = vrcp.pop %v217
    %v246 = vmul.f32 1.0, %v245
    %v247 = vrcp.pop %v218
    %v248 = vmul.f32 1.0, %v247
    %v249 = vrcp.pop %v219
    %v250 = vmul.f32 1.0, %v249
    %v251 = vrcp.pop %v220
    %v252 = vmul.f32 1.0, %v251
    %v253 = vmul.f32 %v222, %v222
    %v254 = vmul.f32 %v224, %v224
    %v255 = vmul.f32 %v226, %v226
    %v256 = vmul.f32 %v228, %v228
    %v257 = vmul.f32 %v230, %v230
    %v258 = vmul.f32 %v232, %v232
    %v259 = vmul.f32 %v234, %v234
    %v260 = vmul.f32 %v236, %v236
    %v261 = vmul.f32 %v238, %v238
    %v262 = vmul.f32 %v240, %v240
    %v263 = vmul.f32 %v242, %v242
    %v264 = vmul.f32 %v244, %v244
    %v265 = vmul.f32 %v246, %v246
    %v266 = vmul.f32 %v248, %v248
    %v267 = vmul.f32 %v250, %v250
    %v268 = vmul.f32 %v252, %v252
    %v269 = vlaneseq
    %v270 = vshrl.u32 %v269, 7
    %v271 = vadd.s32 %v270, 8
    %v272 = vlaneseq
    %v273 = vand.u32 %v272, 127
    %v274 = vadd.s32 %v270, %v273
    %v275 = vadd.s32 %v271, %v273
    %vm276 = vcmp.eq.s32.totalorder %v274, 15
    %vm277 = vcmp.eq.s32.totalorder %v275, 15
    %v278 = vsel %vm276, 1, 0
    %v279 = vsel %vm277, 1, 0
    %v280 = vcvt.s32.f32 %v278
    %v281 = vcvt.s32.f32 %v279
    %v283 = vsel %vm44, %v12, 0
    %v286 = vsel %vm44, %v13, 0
    %v289 = vsel %vm44, %v14, 0
    %v292 = vsel %vm44, %v15, 0
    %v295 = vsel %vm44, %v16, 0
    %v298 = vsel %vm44, %v17, 0
    %v301 = vsel %vm44, %v18, 0
    %v304 = vsel %vm44, %v19, 0
    %v307 = vsel %vm44, %v20, 0
    %v310 = vsel %vm44, %v21, 0
    %v313 = vsel %vm44, %v22, 0
    %v316 = vsel %vm44, %v23, 0
    %v319 = vsel %vm44, %v24, 0
    %v322 = vsel %vm44, %v25, 0
    %v325 = vsel %vm44, %v26, 0
    %v328 = vsel %vm44, %v27, 0
    %330 = vmatprep.subr.mxu0 0.0
    %331 = vmatpush1.msra.mxu0 %v280
    %332 = vmatprep.subr.mxu0 0.0
    %333 = vmatpush1.msra.mxu0 %v281
    %334 = vmatprep.subr.mxu0 0.0
    %335 = vmatpush1.msra.mxu0 0.0
    %336 = vmatprep.subr.mxu0 0.0
    %337 = vmatpush1.msra.mxu0 0.0
    %338 = vmatprep.subr.mxu0 0.0
    %339 = vmatpush1.msra.mxu0 0.0
    %340 = vmatprep.subr.mxu0 0.0
    %341 = vmatpush1.msra.mxu0 0.0
    %342 = vmatprep.subr.mxu0 0.0
    %343 = vmatpush1.msra.mxu0 0.0
    %344 = vmatprep.subr.mxu0 0.0
    %345 = vmatpush1.msra.mxu0 0.0
    %346 = vmatprep.subr.mxu0 0.0
    %347 = vmatpush1.msra.mxu0 0.0
    %348 = vmatprep.subr.mxu0 0.0
    %349 = vmatpush1.msra.mxu0 0.0
    %350 = vmatprep.subr.mxu0 0.0
    %351 = vmatpush1.msra.mxu0 0.0
    %352 = vmatprep.subr.mxu0 0.0
    %353 = vmatpush1.msra.mxu0 0.0
    %354 = vmatprep.subr.mxu0 0.0
    %355 = vmatpush1.msra.mxu0 0.0
    %356 = vmatprep.subr.mxu0 0.0
    %357 = vmatpush1.msra.mxu0 0.0
    %358 = vmatprep.subr.mxu0 0.0
    %359 = vmatpush1.msra.mxu0 0.0
    %360 = vmatprep.subr.mxu0 0.0
    %361 = vmatpush1.msra.mxu0 0.0
    %362 = vmatprep.subr.mxu0 0.0
    %363 = vmatpush1.msra.mxu0 0.0
    %364 = vmatprep.subr.mxu0 0.0
    %365 = vmatpush1.msra.mxu0 0.0
    %366 = vmatprep.subr.mxu0 0.0
    %367 = vmatpush1.msra.mxu0 0.0
    %368 = vmatprep.subr.mxu0 0.0
    %369 = vmatpush1.msra.mxu0 0.0
    %370 = vmatprep.subr.mxu0 0.0
    %371 = vmatpush1.msra.mxu0 0.0
    %372 = vmatprep.subr.mxu0 0.0
    %373 = vmatpush1.msra.mxu0 0.0
    %374 = vmatprep.subr.mxu0 0.0
    %375 = vmatpush1.msra.mxu0 0.0
    %376 = vmatprep.subr.mxu0 0.0
    %377 = vmatpush1.msra.mxu0 0.0
    %378 = vmatprep.subr.mxu0 0.0
    %379 = vmatpush1.msra.mxu0 0.0
    %380 = vmatprep.subr.mxu0 0.0
    %381 = vmatpush1.msra.mxu0 0.0
    %382 = vmatprep.subr.mxu0 0.0
    %383 = vmatpush1.msra.mxu0 0.0
    %384 = vmatprep.subr.mxu0 0.0
    %385 = vmatpush1.msra.mxu0 0.0
    %386 = vmatprep.subr.mxu0 0.0
    %387 = vmatpush1.msra.mxu0 0.0
    %388 = vmatprep.subr.mxu0 0.0
    %389 = vmatpush1.msra.mxu0 0.0
    %390 = vmatprep.subr.mxu0 0.0
    %391 = vmatpush1.msra.mxu0 0.0
    %392 = vmatprep.subr.mxu0 0.0
    %393 = vmatpush1.msra.mxu0 0.0
    %394 = vmatprep.mubr.f32.mxu0 0.0
    %395 = vmatmul.mubr.f32.gmra.mrb[0].mxu0 %v283
    %v396 = vpop.f32.mrb[0].mxu0
    %v397 = vadd.f32 0.0, %v396
    %v398 = vpop.f32.mrb[0].mxu0
    %399 = vmatprep.mubr.f32.mxu0 0.0
    %400 = vmatmul.mubr.f32.gmra.mrb[0].mxu0 %v286
    %v401 = vpop.f32.mrb[0].mxu0
    %v402 = vadd.f32 0.0, %v401
    %v403 = vpop.f32.mrb[0].mxu0
    %404 = vmatprep.mubr.f32.mxu0 0.0
    %405 = vmatmul.mubr.f32.gmra.mrb[0].mxu0 %v289
    %v406 = vpop.f32.mrb[0].mxu0
    %v407 = vadd.f32 0.0, %v406
    %v408 = vpop.f32.mrb[0].mxu0
    %409 = vmatprep.mubr.f32.mxu0 0.0
    %410 = vmatmul.mubr.f32.gmra.mrb[0].mxu0 %v292
    %v411 = vpop.f32.mrb[0].mxu0
    %v412 = vadd.f32 0.0, %v411
    %v413 = vpop.f32.mrb[0].mxu0
    %414 = vmatprep.mubr.f32.mxu0 0.0
    %415 = vmatmul.mubr.f32.gmra.mrb[0].mxu0 %v295
    %v416 = vpop.f32.mrb[0].mxu0
    %v417 = vadd.f32 0.0, %v416
    %v418 = vpop.f32.mrb[0].mxu0
    %419 = vmatprep.mubr.f32.mxu0 0.0
    %420 = vmatmul.mubr.f32.gmra.mrb[0].mxu0 %v298
    %v421 = vpop.f32.mrb[0].mxu0
    %v422 = vadd.f32 0.0, %v421
    %v423 = vpop.f32.mrb[0].mxu0
    %424 = vmatprep.mubr.f32.mxu0 0.0
    %425 = vmatmul.mubr.f32.gmra.mrb[0].mxu0 %v301
    %v426 = vpop.f32.mrb[0].mxu0
    %v427 = vadd.f32 0.0, %v426
    %v428 = vpop.f32.mrb[0].mxu0
    %429 = vmatprep.mubr.f32.mxu0 0.0
    %430 = vmatmul.mubr.f32.gmra.mrb[0].mxu0 %v304
    %v431 = vpop.f32.mrb[0].mxu0
    %v432 = vadd.f32 0.0, %v431
    %v433 = vpop.f32.mrb[0].mxu0
    %434 = vmatprep.mubr.f32.mxu0 0.0
    %435 = vmatmul.mubr.f32.gmra.mrb[0].mxu0 %v307
    %v436 = vpop.f32.mrb[0].mxu0
    %v437 = vadd.f32 0.0, %v436
    %v438 = vpop.f32.mrb[0].mxu0
    %439 = vmatprep.mubr.f32.mxu0 0.0
    %440 = vmatmul.mubr.f32.gmra.mrb[0].mxu0 %v310
    %v441 = vpop.f32.mrb[0].mxu0
    %v442 = vadd.f32 0.0, %v441
    %v443 = vpop.f32.mrb[0].mxu0
    %444 = vmatprep.mubr.f32.mxu0 0.0
    %445 = vmatmul.mubr.f32.gmra.mrb[0].mxu0 %v313
    %v446 = vpop.f32.mrb[0].mxu0
    %v447 = vadd.f32 0.0, %v446
    %v448 = vpop.f32.mrb[0].mxu0
    %449 = vmatprep.mubr.f32.mxu0 0.0
    %450 = vmatmul.mubr.f32.gmra.mrb[0].mxu0 %v316
    %v451 = vpop.f32.mrb[0].mxu0
    %v452 = vadd.f32 0.0, %v451
    %v453 = vpop.f32.mrb[0].mxu0
    %454 = vmatprep.mubr.f32.mxu0 0.0
    %455 = vmatmul.mubr.f32.gmra.mrb[0].mxu0 %v319
    %v456 = vpop.f32.mrb[0].mxu0
    %v457 = vadd.f32 0.0, %v456
    %v458 = vpop.f32.mrb[0].mxu0
    %459 = vmatprep.mubr.f32.mxu0 0.0
    %460 = vmatmul.mubr.f32.gmra.mrb[0].mxu0 %v322
    %v461 = vpop.f32.mrb[0].mxu0
    %v462 = vadd.f32 0.0, %v461
    %v463 = vpop.f32.mrb[0].mxu0
    %464 = vmatprep.mubr.f32.mxu0 0.0
    %465 = vmatmul.mubr.f32.gmra.mrb[0].mxu0 %v325
    %v466 = vpop.f32.mrb[0].mxu0
    %v467 = vadd.f32 0.0, %v466
    %v468 = vpop.f32.mrb[0].mxu0
    %469 = vmatprep.mubr.f32.mxu0 0.0
    %470 = vmatmul.mubr.f32.gmra.mrb[0].mxu0 %v328
    %v471 = vpop.f32.mrb[0].mxu0
    %v472 = vadd.f32 0.0, %v471
    %v473 = vpop.f32.mrb[0].mxu0
    %474 = vdwg.mxu0
    %v475 = vmul.f32 %v12, %v397
    %v476 = vmul.f32 %v13, %v402
    %v477 = vmul.f32 %v14, %v407
    %v478 = vmul.f32 %v15, %v412
    %v479 = vmul.f32 %v16, %v417
    %v480 = vmul.f32 %v17, %v422
    %v481 = vmul.f32 %v18, %v427
    %v482 = vmul.f32 %v19, %v432
    %v483 = vmul.f32 %v20, %v437
    %v484 = vmul.f32 %v21, %v442
    %v485 = vmul.f32 %v22, %v447
    %v486 = vmul.f32 %v23, %v452
    %v487 = vmul.f32 %v24, %v457
    %v488 = vmul.f32 %v25, %v462
    %v489 = vmul.f32 %v26, %v467
    %v490 = vmul.f32 %v27, %v472
    %v491 = vsel %vm44, %v475, 0.0
    %492 = vadd.xlane.f32.xlu0 %v491
    %v493 = vpop.xlane.xlu0 %492
    %v494 = vsel %vm44, %v476, 0.0
    %495 = vadd.xlane.f32.xlu0 %v494
    %v496 = vpop.xlane.xlu0 %495
    %v497 = vsel %vm44, %v477, 0.0
    %498 = vadd.xlane.f32.xlu0 %v497
    %v499 = vpop.xlane.xlu0 %498
    %v500 = vsel %vm44, %v478, 0.0
    %501 = vadd.xlane.f32.xlu0 %v500
    %v502 = vpop.xlane.xlu0 %501
    %v503 = vsel %vm44, %v479, 0.0
    %504 = vadd.xlane.f32.xlu0 %v503
    %v505 = vpop.xlane.xlu0 %504
    %v506 = vsel %vm44, %v480, 0.0
    %507 = vadd.xlane.f32.xlu0 %v506
    %v508 = vpop.xlane.xlu0 %507
    %v509 = vsel %vm44, %v481, 0.0
    %510 = vadd.xlane.f32.xlu0 %v509
    %v511 = vpop.xlane.xlu0 %510
    %v512 = vsel %vm44, %v482, 0.0
    %513 = vadd.xlane.f32.xlu0 %v512
    %v514 = vpop.xlane.xlu0 %513
    %v515 = vsel %vm44, %v483, 0.0
    %516 = vadd.xlane.f32.xlu0 %v515
    %v517 = vpop.xlane.xlu0 %516
    %v518 = vsel %vm44, %v484, 0.0
    %519 = vadd.xlane.f32.xlu0 %v518
    %v520 = vpop.xlane.xlu0 %519
    %v521 = vsel %vm44, %v485, 0.0
    %522 = vadd.xlane.f32.xlu0 %v521
    %v523 = vpop.xlane.xlu0 %522
    %v524 = vsel %vm44, %v486, 0.0
    %525 = vadd.xlane.f32.xlu0 %v524
    %v526 = vpop.xlane.xlu0 %525
    %v527 = vsel %vm44, %v487, 0.0
    %528 = vadd.xlane.f32.xlu0 %v527
    %v529 = vpop.xlane.xlu0 %528
    %v530 = vsel %vm44, %v488, 0.0
    %531 = vadd.xlane.f32.xlu0 %v530
    %v532 = vpop.xlane.xlu0 %531
    %v533 = vsel %vm44, %v489, 0.0
    %534 = vadd.xlane.f32.xlu0 %v533
    %v535 = vpop.xlane.xlu0 %534
    %v536 = vsel %vm44, %v490, 0.0
    %537 = vadd.xlane.f32.xlu0 %v536
    %v538 = vpop.xlane.xlu0 %537
    %v539 = vmul.f32 %v493, %v253
    %v540 = vmul.f32 %v496, %v254
    %v541 = vmul.f32 %v499, %v255
    %v542 = vmul.f32 %v502, %v256
    %v543 = vmul.f32 %v505, %v257
    %v544 = vmul.f32 %v508, %v258
    %v545 = vmul.f32 %v511, %v259
    %v546 = vmul.f32 %v514, %v260
    %v547 = vmul.f32 %v517, %v261
    %v548 = vmul.f32 %v520, %v262
    %v549 = vmul.f32 %v523, %v263
    %v550 = vmul.f32 %v526, %v264
    %v551 = vmul.f32 %v529, %v265
    %v552 = vmul.f32 %v532, %v266
    %v553 = vmul.f32 %v535, %v267
    %v554 = vmul.f32 %v538, %v268
    %v555 = vmul.f32 %v47, %v253
    %v556 = vmul.f32 %v50, %v254
    %v557 = vmul.f32 %v53, %v255
    %v558 = vmul.f32 %v56, %v256
    %v559 = vmul.f32 %v59, %v257
    %v560 = vmul.f32 %v62, %v258
    %v561 = vmul.f32 %v65, %v259
    %v562 = vmul.f32 %v68, %v260
    %v563 = vmul.f32 %v71, %v261
    %v564 = vmul.f32 %v74, %v262
    %v565 = vmul.f32 %v77, %v263
    %v566 = vmul.f32 %v80, %v264
    %v567 = vmul.f32 %v83, %v265
    %v568 = vmul.f32 %v86, %v266
    %v569 = vmul.f32 %v89, %v267
    %v570 = vmul.f32 %v92, %v268
    %v571 = vmax.f32 %v555, 1e-08
    %v572 = vmax.f32 %v556, 1e-08
    %v573 = vmax.f32 %v557, 1e-08
    %v574 = vmax.f32 %v558, 1e-08
    %v575 = vmax.f32 %v559, 1e-08
    %v576 = vmax.f32 %v560, 1e-08
    %v577 = vmax.f32 %v561, 1e-08
    %v578 = vmax.f32 %v562, 1e-08
    %v579 = vmax.f32 %v563, 1e-08
    %v580 = vmax.f32 %v564, 1e-08
    %v581 = vmax.f32 %v565, 1e-08
    %v582 = vmax.f32 %v566, 1e-08
    %v583 = vmax.f32 %v567, 1e-08
    %v584 = vmax.f32 %v568, 1e-08
    %v585 = vmax.f32 %v569, 1e-08
    %v586 = vmax.f32 %v570, 1e-08
    %v587 = vrcp.pop %v571
    %v588 = vmul.f32 %v539, %v587
    %v589 = vrcp.pop %v572
    %v590 = vmul.f32 %v540, %v589
    %v591 = vrcp.pop %v573
    %v592 = vmul.f32 %v541, %v591
    %v593 = vrcp.pop %v574
    %v594 = vmul.f32 %v542, %v593
    %v595 = vrcp.pop %v575
    %v596 = vmul.f32 %v543, %v595
    %v597 = vrcp.pop %v576
    %v598 = vmul.f32 %v544, %v597
    %v599 = vrcp.pop %v577
    %v600 = vmul.f32 %v545, %v599
    %v601 = vrcp.pop %v578
    %v602 = vmul.f32 %v546, %v601
    %v603 = vrcp.pop %v579
    %v604 = vmul.f32 %v547, %v603
    %v605 = vrcp.pop %v580
    %v606 = vmul.f32 %v548, %v605
    %v607 = vrcp.pop %v581
    %v608 = vmul.f32 %v549, %v607
    %v609 = vrcp.pop %v582
    %v610 = vmul.f32 %v550, %v609
    %v611 = vrcp.pop %v583
    %v612 = vmul.f32 %v551, %v611
    %v613 = vrcp.pop %v584
    %v614 = vmul.f32 %v552, %v613
    %v615 = vrcp.pop %v585
    %v616 = vmul.f32 %v553, %v615
    %v617 = vrcp.pop %v586
    %v618 = vmul.f32 %v554, %v617
    %v619 = vadd.f32 %v588, %v590
    %v620 = vadd.f32 %v619, %v592
    %v621 = vadd.f32 %v620, %v594
    %v622 = vadd.f32 %v621, %v596
    %v623 = vadd.f32 %v622, %v598
    %v624 = vadd.f32 %v623, %v600
    %v625 = vadd.f32 %v624, %v602
    %v626 = vrot.slane %v625, 4
    %v627 = vadd.f32 %v625, %v626
    %v628 = vrot.slane %v627, 2
    %v629 = vadd.f32 %v627, %v628
    %v630 = vrot.slane %v629, 1
    %v631 = vadd.f32 %v629, %v630
    %v632 = vadd.f32 %v604, %v606
    %v633 = vadd.f32 %v632, %v608
    %v634 = vadd.f32 %v633, %v610
    %v635 = vadd.f32 %v634, %v612
    %v636 = vadd.f32 %v635, %v614
    %v637 = vadd.f32 %v636, %v616
    %v638 = vadd.f32 %v637, %v618
    %v639 = vrot.slane %v638, 4
    %v640 = vadd.f32 %v638, %v639
    %v641 = vrot.slane %v640, 2
    %v642 = vadd.f32 %v640, %v641
    %v643 = vrot.slane %v642, 1
    %v644 = vadd.f32 %v642, %v643
    %v645 = vmul.f32 %v631, 0.015625
    %v646 = vmul.f32 %v644, 0.015625
    %s647 = smul.u32 0, 2
    %v648 = vstv %s647
    %v649 = vadd.s32 %v648, %v270
    %vm650 = vcmp.lt.s32.totalorder %v649, 2
    %vm653 = vcmask 1041409
    %v654 = vsel %vm653, %v646, %v645
    %v656 = vsel %vm650, %v654, 0.0
    %v657 = vld [vmem:[%s0] sm:$0x3]
    %vm658 = vcmp.eq.s32.totalorder %v657, 0
    %vm659 = vcmp.eq.s32.totalorder %v657, 1
    %vm660 = vmor %vm658, %vm659
    %vm661 = vmand %vm660, %vm650
    %v662 = vsel %vm658, -1.0, 1.0
    %v663 = vsel %vm661, 1, 0
    %v664 = vcvt.s32.f32 %v663
    %v665 = vmul.f32 %v662, %v656
    %v666 = vmul.f32 %v665, 1.442695
    %v667 = vpow.pop %v666
    %v668 = vmul.f32 %v664, %v667
    %vm669 = vcmask 1024
    %v670 = vsel %vm669, %v668, 0.0
    %v671 = vrot.slane %v670, 4
    %v672 = vadd.f32 %v670, %v671
    %v673 = vrot.slane %v672, 2
    %v674 = vadd.f32 %v672, %v673
    %v675 = vrot.slane %v674, 1
    %v676 = vadd.f32 %v674, %v675
    %678 = vset.pattern.permute.xlu0 0
    %679 = vperm.xlu0 %678, %v676
    %v680 = vpop.permute.xlu0 %679
    %682 = vst [vmem:[#allocation2] sm:$0x1] %v680
    // Predicated region
    $region10: #{tpu_custom_call.1} parent=1 // pred_check
      _
    $region11: #{tpu_custom_call.1} parent=1 // pred_check_branch
      %684 = sbr.rel (0) target = $region13
    $region12: #{tpu_custom_call.1} parent=1 // pred_region
      %s686 = ssub.s32 16, 16
      %687 = vsyncadd [#allocation3], %s686
      %s689 = sshll.u32 [#allocation2], 4
      %s690 = int_to_ptr.vmem [resolvable:$true] %s689
      %692 = dma.vmem_to_hbm [thread:$0]  %s690, 16, %s2, [#allocation3]
    $region13: #{tpu_custom_call.1} parent=1 // pred_fallthru
      _
    // Predicated region
    $region14: #{tpu_custom_call.1} parent=1 // pred_check
      _
    $region15: #{tpu_custom_call.1} parent=1 // pred_check_branch
      %694 = sbr.rel (0) target = $region17
    $region16: #{tpu_custom_call.1} parent=1 // pred_region
      %695 = dma.done [#allocation3], 16
    $region17: #{tpu_custom_call.1} parent=1 // pred_fallthru
      _
    %696 = vsyncpa [#allocation3], 1

</llo_original>
